<compile_context>
chip_gen: v7x
topology: tpu7x:2x2x1
jax: 0.10.0
libtpu: 0.0.40
codegen_flags: <defaults>
</compile_context>

<pallas_src>
import jax
import jax.numpy as jnp
from jax.experimental import pallas as pl
from jax.experimental.pallas import tpu as pltpu


def add_kernel(x_ref, y_ref, o_ref):
    # Whole-tile elementwise add on the VPU (lane-dense, unmasked stores).
    o_ref[...] = x_ref[...] + y_ref[...]


def _round_up(a, b):
    return ((a + b - 1) // b) * b


def _pallas_add_2d(xf, yf, *, dtype):
    """Add two (rows, lane) slabs; lane is a multiple of 128."""
    rows, lane = xf.shape
    itemsize = jnp.dtype(dtype).itemsize
    # Native sublane multiple for this dtype: f32 -> 8, bf16 -> 16, int8 -> 32.
    sub = max(8, 32 // itemsize)

    # Size the block by bytes (~4 MiB per buffer), rounded to the sublane tile.
    target_bytes = 4 << 20
    rows_per_block = _round_up(max(sub, target_bytes // (lane * itemsize)), sub)

    # Keep at least 2 grid steps when the slab is splittable so the "parallel"
    # axis can be sharded across v7x's two TensorCores (no effect on v5e/v6e).
    if rows >= 2 * sub:
        rows_per_block = min(rows_per_block, _round_up(pl.cdiv(rows, 2), sub))

    if rows_per_block >= rows:
        rows_per_block = rows  # single full-extent block (always a legal tile)

    grid = (pl.cdiv(rows, rows_per_block),)  # partial last block is fine
    block = (rows_per_block, lane)
    n_elems = rows * lane

    return pl.pallas_call(
        add_kernel,
        out_shape=jax.ShapeDtypeStruct((rows, lane), dtype),
        grid_spec=pltpu.PrefetchScalarGridSpec(
            num_scalar_prefetch=0,
            grid=grid,
            in_specs=[
                pl.BlockSpec(block, lambda i: (i, 0)),
                pl.BlockSpec(block, lambda i: (i, 0)),
            ],
            out_specs=pl.BlockSpec(block, lambda i: (i, 0)),
        ),
        compiler_params=pltpu.CompilerParams(
            dimension_semantics=("parallel",),
            # 3 arrays x 2 buffers x ~4 MiB = ~24 MiB; raise the scoped limit
            # explicitly (v5e default is 16 MiB) while staying well under
            # physical VMEM on every chip.
            vmem_limit_bytes=32 << 20,
        ),
        cost_estimate=pl.CostEstimate(
            flops=n_elems,
            transcendentals=0,
            bytes_accessed=3 * n_elems * itemsize,
        ),
    )(xf, yf)


def pallas_add(x, x_1):
    """Elementwise add of two same-shaped tensors via a Pallas TPU kernel."""
    assert x.shape == x_1.shape, (x.shape, x_1.shape)
    assert x.dtype == x_1.dtype, (x.dtype, x_1.dtype)

    orig_shape = x.shape
    dtype = x.dtype
    total = x.size

    # Widest lane count in {512, 256, 128} that divides the element count:
    # the flatten below is then a free bitcast (no pad, no output slice).
    lane = next((l for l in (512, 256, 128) if total % l == 0), None)

    if lane is not None:
        rows = total // lane
        out = _pallas_add_2d(
            x.reshape(rows, lane), x_1.reshape(rows, lane), dtype=dtype
        )
        return out.reshape(orig_shape)

    # Fallback (total not a multiple of 128, rare for NN shapes): run the
    # divisible bulk through the kernel and add the <128-element tail with
    # plain jnp instead of materializing zero-padded copies of both operands.
    lane = 128
    bulk = (total // lane) * lane
    xf = x.reshape(-1)
    yf = x_1.reshape(-1)
    if bulk == 0:
        return (x + x_1)  # tiny tensor: not worth a kernel launch
    head = _pallas_add_2d(
        xf[:bulk].reshape(-1, lane), yf[:bulk].reshape(-1, lane), dtype=dtype
    )
    tail = xf[bulk:] + yf[bulk:]
    return jnp.concatenate([head.reshape(-1), tail]).reshape(orig_shape)


if __name__ == "__main__":
    key = jax.random.PRNGKey(0)
    k1, k2 = jax.random.split(key)
    # Small NCHW inputs consistent with the module's two same-shaped operands.
    x = jax.random.normal(k1, (2, 4, 16, 16), dtype=jnp.float32)
    x_1 = jax.random.normal(k2, (2, 4, 16, 16), dtype=jnp.float32)

    y = pallas_add(x, x_1)
    jax.block_until_ready(y)

    ref = x + x_1  # torch.add(x, x_1)
    assert y.shape == ref.shape, (y.shape, ref.shape)
    assert y.dtype == ref.dtype, (y.dtype, ref.dtype)
    assert jnp.allclose(y, ref), "Pallas add mismatch vs reference"

    print("KERNEL_OK")
</pallas_src>

<mosaic_0001>
module attributes {stable_mosaic.version = 11 : i64} {
  func.func @add_kernel(%arg0: i32, %arg1: memref<4x512xf32, #tpu.memory_space<vmem>>, %arg2: memref<4x512xf32, #tpu.memory_space<vmem>>, %arg3: memref<4x512xf32, #tpu.memory_space<vmem>>) attributes {dimension_semantics = [#tpu.dimension_semantics<parallel>], iteration_bounds = array<i64: 1>, scalar_prefetch = 0 : i64, scratch_operands = 0 : i64, tpu.core_type = #tpu.core_type<tc>, window_params = [{transform_indices = @transform_0, window_bounds = array<i64: 4, 512>}, {transform_indices = @transform_1, window_bounds = array<i64: 4, 512>}, {transform_indices = @transform_2, window_bounds = array<i64: 4, 512>}]} {
    %c0 = arith.constant 0 : index
    %c0_0 = arith.constant 0 : index
    %0 = vector.load %arg1[%c0, %c0_0] : memref<4x512xf32, #tpu.memory_space<vmem>>, vector<4x512xf32>
    %c0_1 = arith.constant 0 : index
    %c0_2 = arith.constant 0 : index
    %1 = vector.load %arg2[%c0_1, %c0_2] : memref<4x512xf32, #tpu.memory_space<vmem>>, vector<4x512xf32>
    %2 = arith.addf %0, %1 : vector<4x512xf32>
    %c0_3 = arith.constant 0 : index
    %c0_4 = arith.constant 0 : index
    %3 = vector.load %arg3[%c0_3, %c0_4] : memref<4x512xf32, #tpu.memory_space<vmem>>, vector<4x512xf32>
    tpu.vector_store %arg3[%c0_3, %c0_4], %2 {strides = array<i32>} : memref<4x512xf32, #tpu.memory_space<vmem>>, vector<4x512xf32>,
    return
  }
  func.func @transform_0(%arg0: i32) -> (i32, i32) {
    %c0_i32 = arith.constant 0 : i32
    %c0_i32_0 = arith.constant 0 : i32
    return %arg0, %c0_i32 : i32, i32
  }
  func.func @transform_1(%arg0: i32) -> (i32, i32) {
    %c0_i32 = arith.constant 0 : i32
    %c0_i32_0 = arith.constant 0 : i32
    return %arg0, %c0_i32 : i32, i32
  }
  func.func @transform_2(%arg0: i32) -> (i32, i32) {
    %c0_i32 = arith.constant 0 : i32
    %c0_i32_0 = arith.constant 0 : i32
    return %arg0, %c0_i32 : i32, i32
  }
}

</mosaic_0001>

<llo_original>
// kernel: tpu_custom_call.1
$region0: #{tpu_custom_call.1}
  #allocation0 [shape = 'u32[]', space=smem, size = 0x4, offset = 0x4, fixed_abs, tag = 'smem constant byte address 0x4 - core index']
  #allocation1 [shape = 'u32[144,128]{1,0:T(1,128)}', space=vmem, size = 0x12000, scoped, tag = 'internal scratch']
  %s0 = inlined_call_operand.hbm [shape: f32[4,512], index: 0, kind: input, shape index: {}]
  %s1 = inlined_call_operand.hbm [shape: f32[4,512], index: 1, kind: input, shape index: {}]
  %s2 = inlined_call_operand.hbm [shape: f32[4,512], index: 2, kind: output, shape index: {}]
  %s3 = sld [smem:[#allocation0]]
  $region26: #{tpu_custom_call.1} parent=0
    _
  %s5 = ssub.s32 1, %s3
  %s6 = scalar_select 0, %s5, %s3
  $region1: #{tpu_custom_call.1} parent=0
    #allocation2 [shape = 'u8[8192]{0}', space=vmem, size = 0x2000, scoped, tag = 'input window, operand 0, single buffered']
    #allocation3 [shape = 's32[1]{0}', space=sflag, size = 0x4, scoped, tag = 'scoped memory for tpu_custom_call.1']
    #allocation4 [shape = 's32[1]{0}', space=sflag, size = 0x4, scoped, tag = 'scoped memory for tpu_custom_call.1']
    #allocation5 [shape = 'u8[8192]{0}', space=vmem, size = 0x2000, scoped, tag = 'input window, operand 1, single buffered']
    #allocation6 [shape = 's32[1]{0}', space=sflag, size = 0x4, scoped, tag = 'scoped memory for tpu_custom_call.1']
    #allocation7 [shape = 'u8[8192]{0}', space=vmem, size = 0x2000, scoped, tag = 'output window, operand 0, single buffered']
    %7 = vsyncpa [#allocation3], 0
    %8 = vsyncpa [#allocation6], 0
    %9 = vsyncpa [#allocation4], 0
    // Predicated region
    $region2: #{tpu_custom_call.1} parent=1 // pred_check
      _
    $region3: #{tpu_custom_call.1} parent=1 // pred_check_branch
      %11 = sbr.rel (0) target = $region5
    $region4: #{tpu_custom_call.1} parent=1 // pred_region
      %s13 = ssub.s32 256, 256
      %14 = vsyncadd [#allocation3], %s13
      %s16 = sshll.u32 [#allocation2], 4
      %s17 = int_to_ptr.vmem [resolvable:$true] %s16
      %19 = dma.hbm_to_vmem [thread:$0]  %s0, 256, %s17, [#allocation3]
    $region5: #{tpu_custom_call.1} parent=1 // pred_fallthru
      _
    // Predicated region
    $region6: #{tpu_custom_call.1} parent=1 // pred_check
      _
    $region7: #{tpu_custom_call.1} parent=1 // pred_check_branch
      %21 = sbr.rel (0) target = $region9
    $region8: #{tpu_custom_call.1} parent=1 // pred_region
      %s23 = ssub.s32 256, 256
      %24 = vsyncadd [#allocation6], %s23
      %s26 = sshll.u32 [#allocation5], 4
      %s27 = int_to_ptr.vmem [resolvable:$true] %s26
      %29 = dma.hbm_to_vmem [thread:$0]  %s1, 256, %s27, [#allocation6]
    $region9: #{tpu_custom_call.1} parent=1 // pred_fallthru
      _
    // Predicated region
    $region10: #{tpu_custom_call.1} parent=1 // pred_check
      _
    $region11: #{tpu_custom_call.1} parent=1 // pred_check_branch
      %31 = sbr.rel (0) target = $region13
    $region12: #{tpu_custom_call.1} parent=1 // pred_region
      %32 = dma.done [#allocation3], 256
    $region13: #{tpu_custom_call.1} parent=1 // pred_fallthru
      _
    // Predicated region
    $region14: #{tpu_custom_call.1} parent=1 // pred_check
      _
    $region15: #{tpu_custom_call.1} parent=1 // pred_check_branch
      %34 = sbr.rel (0) target = $region17
    $region16: #{tpu_custom_call.1} parent=1 // pred_region
      %35 = dma.done [#allocation6], 256
    $region17: #{tpu_custom_call.1} parent=1 // pred_fallthru
      _
    %v36 = vld [vmem:[#allocation2] sm:$0xff]
    %v37 = vld [vmem:[#allocation2 + $0x8] sm:$0xff]
    %v38 = vld [vmem:[#allocation5] sm:$0xff]
    %v39 = vld [vmem:[#allocation5 + $0x8] sm:$0xff]
    %v40 = vadd.f32 %v36, %v38
    %v41 = vadd.f32 %v37, %v39
    %42 = vst [vmem:[#allocation7] sm:$0xff] %v40
    %43 = vst [vmem:[#allocation7 + $0x8] sm:$0xff] %v41
    // Predicated region
    $region18: #{tpu_custom_call.1} parent=1 // pred_check
      _
    $region19: #{tpu_custom_call.1} parent=1 // pred_check_branch
      %45 = sbr.rel (0) target = $region21
    $region20: #{tpu_custom_call.1} parent=1 // pred_region
      %s47 = ssub.s32 256, 256
      %48 = vsyncadd [#allocation4], %s47
      %s50 = sshll.u32 [#allocation7], 4
      %s51 = int_to_ptr.vmem [resolvable:$true] %s50
      %53 = dma.vmem_to_hbm [thread:$0]  %s51, 256, %s2, [#allocation4]
    $region21: #{tpu_custom_call.1} parent=1 // pred_fallthru
      _
    // Predicated region
    $region22: #{tpu_custom_call.1} parent=1 // pred_check
      _
    $region23: #{tpu_custom_call.1} parent=1 // pred_check_branch
      %55 = sbr.rel (0) target = $region25
    $region24: #{tpu_custom_call.1} parent=1 // pred_region
      %56 = dma.done [#allocation4], 256
    $region25: #{tpu_custom_call.1} parent=1 // pred_fallthru
      _
    %57 = vsyncpa [#allocation3], 1
    %58 = vsyncpa [#allocation6], 1
    %59 = vsyncpa [#allocation4], 1

</llo_original>
